<compile_context>
chip_gen: v6e
topology: v6e:2x2x1
jax: 0.10.0
libtpu: 0.0.40
codegen_flags: <defaults>
</compile_context>

<pallas_src>
import math
from functools import partial

import jax
import jax.numpy as jnp
from jax.experimental import pallas as pl
from jax.experimental.pallas import tpu as pltpu


# ----------------------------------------------------------------------------
# helpers
# ----------------------------------------------------------------------------
def _round_up(x, m):
    return ((x + m - 1) // m) * m


_LOG_SQRT_2PI = math.log(math.sqrt(2.0 * math.pi))


# ----------------------------------------------------------------------------
# Pallas kernel: one batch tile of   mean = x @ W + b   (unpadded output)
# ----------------------------------------------------------------------------
def _mean_kernel(x_ref, w_ref, b_ref, o_ref):
    # x_ref: [TB, D], w_ref: [D, A], b_ref: [1, A], o_ref: [TB, A]
    o_ref[...] = (
        jnp.dot(x_ref[...], w_ref[...], preferred_element_type=jnp.float32)
        + b_ref[...]
    ).astype(o_ref.dtype)


def diag_gaussian_mean_pallas(x, weight_t, bias_row, *, block_batch=2048):
    """Batch-tiled Pallas linear layer.  Returns the mean [B, A] (unpadded)."""
    B, D = x.shape
    D2, A = weight_t.shape
    assert D == D2 and bias_row.shape == (1, A)

    itemsize = 4  # float32

    # Generation-aware VMEM budget (~30% headroom; v7x has only 64 MiB).
    try:
        vmem_cap = int(pltpu.get_tpu_info().vmem_capacity_bytes)
    except Exception:
        vmem_cap = 64 << 20  # conservative lower bound across generations
    budget = int(vmem_cap * 0.7)

    # Per-step footprint: double-buffered x/out tiles + single-buffered weight/bias.
    resident = (D * A + A) * itemsize
    per_row = 2 * (D + A) * itemsize
    tb_cap = max(8, (budget - resident) // max(per_row, 1))

    TB = min(block_batch, tb_cap, _round_up(B, 8))
    TB = max(8, (TB // 8) * 8)

    # Keep >= 2 grid steps when possible so the "parallel" batch axis can be
    # sharded across v7x's two TensorCores (no-op cost on v5e/v6e).
    if pl.cdiv(B, TB) < 2 and B >= 16:
        TB = max(8, _round_up(pl.cdiv(B, 2), 8))

    grid = (pl.cdiv(B, TB),)

    vmem_bytes = TB * per_row + 2 * resident + (1 << 20)
    vmem_bytes = int(min(max(vmem_bytes, 4 << 20), budget))

    return pl.pallas_call(
        _mean_kernel,
        out_shape=jax.ShapeDtypeStruct((B, A), jnp.float32),
        grid_spec=pltpu.PrefetchScalarGridSpec(
            num_scalar_prefetch=0,
            grid=grid,
            in_specs=[
                # x tile: streamed over the batch (double-buffered by default).
                pl.BlockSpec((TB, D), lambda i: (i, 0)),
                # Weight / bias: constant index map -> resident; single buffer.
                pl.BlockSpec((D, A), lambda i: (0, 0),
                             pipeline_mode=pl.Buffered(1)),
                pl.BlockSpec((1, A), lambda i: (0, 0),
                             pipeline_mode=pl.Buffered(1)),
            ],
            out_specs=pl.BlockSpec((TB, A), lambda i: (i, 0)),
        ),
        compiler_params=pltpu.CompilerParams(
            dimension_semantics=("parallel",),
            vmem_limit_bytes=vmem_bytes,
        ),
    )(x, weight_t, bias_row)


# ----------------------------------------------------------------------------
# jitted forward: pallas matmul (or fused XLA dense) + tiny [A]-sized std row.
# ----------------------------------------------------------------------------
@partial(jax.jit,
         static_argnames=("std_x_coef", "std_y_coef", "block_batch",
                          "use_pallas"))
def _diag_gaussian_forward(x, weight_t, bias_row, log_std, *,
                           std_x_coef, std_y_coef, block_batch, use_pallas):
    if use_pallas:
        mean = diag_gaussian_mean_pallas(x, weight_t, bias_row,
                                         block_batch=block_batch)
    else:
        mean = x @ weight_t + bias_row
    # Tiny [A]-sized elementwise op; never materialized as a [B, A] tensor.
    std_row = jax.nn.sigmoid(log_std * (1.0 / std_x_coef)) * std_y_coef
    return mean, std_row


# ----------------------------------------------------------------------------
# FixedNormal: thin JAX wrapper mirroring torch.distributions.Normal.
# std is kept as a broadcastable row and only broadcast lazily.
# ----------------------------------------------------------------------------
class FixedNormal:
    def __init__(self, mean, std_row):
        self.mean = mean
        self._std_row = std_row

    @property
    def std(self):
        return jnp.broadcast_to(self._std_row, self.mean.shape)

    def log_probs(self, actions):
        # Per-dimension log-probs (matches the reference FixedNormal.log_probs).
        std = self._std_row
        var = std ** 2
        return (-((actions - self.mean) ** 2) / (2.0 * var)
                - jnp.log(std) - _LOG_SQRT_2PI)

    def entropy(self):
        ent = 0.5 + 0.5 * math.log(2.0 * math.pi) + jnp.log(self._std_row)
        return jnp.broadcast_to(ent, self.mean.shape).sum(-1)

    def mode(self):
        return self.mean


# ----------------------------------------------------------------------------
# DiagGaussian module
# ----------------------------------------------------------------------------
class DiagGaussian:
    def __init__(self, num_inputs, num_outputs, gain=0.01, args=None,
                 key=jax.random.PRNGKey(0),
                 block_batch=2048, min_pallas_batch=1024):
        if args is not None:
            self.std_x_coef = float(args['std_x_coef'])
            self.std_y_coef = float(args['std_y_coef'])
        else:
            self.std_x_coef = 1.0
            self.std_y_coef = 0.5
        self.num_inputs = num_inputs
        self.num_outputs = num_outputs
        self.block_batch = block_batch
        self.min_pallas_batch = min_pallas_batch

        # orthogonal_ init with gain, zero bias (as in harl's init_()).
        w = jax.nn.initializers.orthogonal(scale=gain)(
            key, (num_outputs, num_inputs), jnp.float32)
        self.weight_t = jnp.asarray(w).T                      # [D, A]
        self.bias_row = jnp.zeros((1, num_outputs), jnp.float32)
        self.log_std = jnp.ones((num_outputs,), jnp.float32) * self.std_x_coef

    def __call__(self, x, available_actions=None, use_pallas=None):
        B, D = x.shape
        if use_pallas is None:
            # Pallas only pays off for large streaming batches with a
            # non-trivial dense; otherwise let XLA fuse the whole thing.
            use_pallas = (B >= self.min_pallas_batch
                          and D * self.num_outputs >= 64 * 1024)
        mean, std_row = _diag_gaussian_forward(
            x, self.weight_t, self.bias_row, self.log_std,
            std_x_coef=self.std_x_coef, std_y_coef=self.std_y_coef,
            block_batch=self.block_batch, use_pallas=bool(use_pallas))
        return FixedNormal(mean, std_row)


# ----------------------------------------------------------------------------
if __name__ == "__main__":
    key = jax.random.PRNGKey(0)
    k_x, k_w = jax.random.split(key)

    # Small shapes; batch=40 with block_batch=16 exercises a multi-step,
    # partially-filled batch grid (16 + 16 + 8 rows).
    batch, num_inputs, num_outputs = 40, 32, 8
    x = jax.random.normal(k_x, (batch, num_inputs), jnp.float32)

    module = DiagGaussian(num_inputs, num_outputs, gain=0.01, key=k_w,
                          block_batch=16)

    # Force the Pallas path (auto-dispatch would use plain JAX at this size).
    dist = module(x, use_pallas=True)

    mean = jax.block_until_ready(dist.mean)
    std = jax.block_until_ready(dist.std)

    # Reference check (plain JAX).
    ref_mean = x @ module.weight_t + module.bias_row
    ref_std = jnp.broadcast_to(
        jax.nn.sigmoid(module.log_std / module.std_x_coef) * module.std_y_coef,
        (batch, num_outputs))
    assert mean.shape == (batch, num_outputs)
    assert std.shape == (batch, num_outputs)
    assert jnp.allclose(mean, ref_mean, atol=1e-5)
    assert jnp.allclose(std, ref_std, atol=1e-6)

    # Large-tile path: grid would collapse to one step, so the wrapper splits
    # it into two (v7x megacore sharding path) with a partial last block.
    mean_big_tile = jax.block_until_ready(
        diag_gaussian_mean_pallas(x, module.weight_t, module.bias_row,
                                  block_batch=2048))
    assert jnp.allclose(mean_big_tile, ref_mean, atol=1e-5)

    # Exercise distribution methods (thin JAX glue, not kernel).
    lp = jax.block_until_ready(dist.log_probs(dist.mode()))
    ent = jax.block_until_ready(dist.entropy())
    ref_lp = (-((ref_mean - ref_mean) ** 2) / (2.0 * ref_std ** 2)
              - jnp.log(ref_std) - _LOG_SQRT_2PI)
    ref_ent = (0.5 + 0.5 * math.log(2.0 * math.pi) + jnp.log(ref_std)).sum(-1)
    assert jnp.allclose(lp, ref_lp, atol=1e-5)
    assert jnp.allclose(ent, ref_ent, atol=1e-5)

    # Also exercise the tiny-batch JAX fallback path once.
    dist_small = module(x[:4])
    _ = jax.block_until_ready(dist_small.mode())

    print("KERNEL_OK")
</pallas_src>

<mosaic_0001>
module attributes {stable_mosaic.version = 11 : i64} {
  func.func @_mean_kernel(%arg0: i32, %arg1: memref<16x32xf32, #tpu.memory_space<vmem>>, %arg2: memref<32x8xf32, #tpu.memory_space<vmem>>, %arg3: memref<1x8xf32, #tpu.memory_space<vmem>>, %arg4: memref<16x8xf32, #tpu.memory_space<vmem>>) attributes {dimension_semantics = [#tpu.dimension_semantics<parallel>], iteration_bounds = array<i64: 3>, scalar_prefetch = 0 : i64, scratch_operands = 0 : i64, tpu.core_type = #tpu.core_type<tc>, window_params = [{transform_indices = @transform_0, window_bounds = array<i64: 16, 32>}, {pipeline_mode = #tpu.pipeline_mode<synchronous>, transform_indices = @transform_1, window_bounds = array<i64: 32, 8>}, {pipeline_mode = #tpu.pipeline_mode<synchronous>, transform_indices = @transform_2, window_bounds = array<i64: 1, 8>}, {transform_indices = @transform_3, window_bounds = array<i64: 16, 8>}]} {
    %c0 = arith.constant 0 : index
    %c0_0 = arith.constant 0 : index
    %0 = vector.load %arg1[%c0, %c0_0] : memref<16x32xf32, #tpu.memory_space<vmem>>, vector<16x32xf32>
    %c0_1 = arith.constant 0 : index
    %c0_2 = arith.constant 0 : index
    %1 = vector.load %arg2[%c0_1, %c0_2] : memref<32x8xf32, #tpu.memory_space<vmem>>, vector<32x8xf32>
    %cst = arith.constant dense<0.000000e+00> : vector<16x8xf32>
    %2 = tpu.matmul %0, %1, %cst {dimension_numbers = #tpu.dot_dimension_numbers<[1], [0], [0], [1], [0, 0, 1, 1], [], []>} : vector<16x32xf32>, vector<32x8xf32>, vector<16x8xf32> -> vector<16x8xf32>
    %c0_3 = arith.constant 0 : index
    %c0_4 = arith.constant 0 : index
    %3 = vector.load %arg3[%c0_3, %c0_4] : memref<1x8xf32, #tpu.memory_space<vmem>>, vector<1x8xf32>
    %4 = vector.broadcast %3 : vector<1x8xf32> to vector<16x8xf32>
    %5 = arith.addf %2, %4 : vector<16x8xf32>
    %c0_5 = arith.constant 0 : index
    %c0_6 = arith.constant 0 : index
    %6 = vector.load %arg4[%c0_5, %c0_6] : memref<16x8xf32, #tpu.memory_space<vmem>>, vector<16x8xf32>
    tpu.vector_store %arg4[%c0_5, %c0_6], %5 {strides = array<i32>} : memref<16x8xf32, #tpu.memory_space<vmem>>, vector<16x8xf32>,
    return
  }
  func.func @transform_0(%arg0: i32) -> (i32, i32) {
    %c0_i32 = arith.constant 0 : i32
    %c0_i32_0 = arith.constant 0 : i32
    return %arg0, %c0_i32 : i32, i32
  }
  func.func @transform_1(%arg0: i32) -> (i32, i32) {
    %c0_i32 = arith.constant 0 : i32
    %c0_i32_0 = arith.constant 0 : i32
    %c0_i32_1 = arith.constant 0 : i32
    return %c0_i32, %c0_i32_0 : i32, i32
  }
  func.func @transform_2(%arg0: i32) -> (i32, i32) {
    %c0_i32 = arith.constant 0 : i32
    %c0_i32_0 = arith.constant 0 : i32
    %c0_i32_1 = arith.constant 0 : i32
    return %c0_i32, %c0_i32_0 : i32, i32
  }
  func.func @transform_3(%arg0: i32) -> (i32, i32) {
    %c0_i32 = arith.constant 0 : i32
    %c0_i32_0 = arith.constant 0 : i32
    return %arg0, %c0_i32 : i32, i32
  }
}

</mosaic_0001>

<llo_original>
// kernel: _diag_gaussian_forward.1
$region0: #{_diag_gaussian_forward.1}
  #allocation0 [shape = 'u32[]', space=smem, size = 0x4, offset = 0x4, fixed_abs, tag = 'smem constant byte address 0x4 - core index']
  #allocation1 [shape = 'u32[144,128]{1,0:T(1,128)}', space=vmem, size = 0x12000, scoped, tag = 'internal scratch']
  %s0 = inlined_call_operand.vmem [shape: f32[40,32], index: 0, kind: input, shape index: {}]
  %s1 = inlined_call_operand.vmem [shape: f32[32,8], index: 1, kind: input, shape index: {}]
  %s2 = inlined_call_operand.vmem [shape: f32[1,8], index: 2, kind: input, shape index: {}]
  %s3 = inlined_call_operand.vmem [shape: f32[40,8], index: 3, kind: output, shape index: {}]
  %s4 = sld [smem:[#allocation0]]
  $region93: #{_diag_gaussian_forward.1} parent=0
    _
  %s6 = ssub.s32 1, %s4
  %s7 = scalar_select 0, %s6, %s4
  $region1: #{_diag_gaussian_forward.1} parent=0
    #allocation2 [shape = 'u8[16384]{0}', space=vmem, size = 0x4000, scoped, tag = 'output window, operand 0']
    loop: start=0, step=1, limit=5
    $region2: #{_diag_gaussian_forward.1} parent=1 // loop_pre_header
      _
    $region3: #{_diag_gaussian_forward.1} parent=1 // loop_header
      %s9 = sphi 0, %s13
      %p10 = scmp.ge.s32.totalorder %s9, 5
      %s19 = sphi 0, %s21
      %s22 = sphi 0, %s19
      %s23 = sphi 0, %s22
      %s39 = sphi 0, %s23
      %s43 = sphi 0, %s43
      %s45 = sphi 0, %s43
      %s46 = sphi 0, %s45
      %s60 = sphi 0, %s46
      %s64 = sphi 0, %s64
      %s66 = sphi 0, %s64
      %s67 = sphi 0, %s66
      %s81 = sphi 0, %s67
      %s87 = sphi 0, %s89
      %s90 = sphi 0, %s87
      %s91 = sphi 0, %s90
      %s107 = sphi 0, %s91
    $region4: #{_diag_gaussian_forward.1} parent=1 // loop_header_branch
      %12 = sbr.rel (%p10) target = $region8
    $region5: #{_diag_gaussian_forward.1} parent=1 // loop_body
      %s14 = ssub.s32 %s9, 1
      %s15 = ssub.s32 %s9, 2
      %s16 = sadd.s32 %s9, 1
      %s17 = ssub.s32 %s9, %s16
      %p18 = scmp.eq.s32.totalorder %s17, 0
      %s20 = sadd.s32 %s19, 1
      %s21 = scalar_select %p18, %s19, %s20
      %p24 = pneg %p18
      %p25 = scmp.eq.s32.totalorder %s9, 2
      %p26 = por %p24, %p25
      %p27 = scmp.ne.s32.totalorder %s19, %s22
      %p28 = scmp.eq.s32.totalorder %s9, 0
      %p29 = por %p27, %p28
      %p30 = scmp.ne.s32.totalorder %s19, %s22
      %p31 = scmp.eq.s32.totalorder %s14, 2
      %p32 = por %p30, %p31
      %p33 = scmp.ne.s32.totalorder %s22, %s23
      %p34 = scmp.eq.s32.totalorder %s14, 0
      %p35 = por %p33, %p34
      %p36 = scmp.ne.s32.totalorder %s22, %s23
      %p37 = scmp.eq.s32.totalorder %s15, 2
      %p38 = por %p36, %p37
      %p40 = scmp.ne.s32.totalorder %s23, %s39
      %p41 = scmp.eq.s32.totalorder %s15, 0
      %p42 = por %p40, %p41
      %s44 = sadd.s32 %s43, 1
      %p47 = scmp.eq.s32.totalorder %s9, 2
      %p48 = scmp.ne.s32.totalorder %s43, %s45
      %p49 = scmp.eq.s32.totalorder %s9, 0
      %p50 = por %p48, %p49
      %p51 = scmp.ne.s32.totalorder %s43, %s45
      %p52 = scmp.eq.s32.totalorder %s14, 2
      %p53 = por %p51, %p52
      %p54 = scmp.ne.s32.totalorder %s45, %s46
      %p55 = scmp.eq.s32.totalorder %s14, 0
      %p56 = por %p54, %p55
      %p57 = scmp.ne.s32.totalorder %s45, %s46
      %p58 = scmp.eq.s32.totalorder %s15, 2
      %p59 = por %p57, %p58
      %p61 = scmp.ne.s32.totalorder %s46, %s60
      %p62 = scmp.eq.s32.totalorder %s15, 0
      %p63 = por %p61, %p62
      %s65 = sadd.s32 %s64, 1
      %p68 = scmp.eq.s32.totalorder %s9, 2
      %p69 = scmp.ne.s32.totalorder %s64, %s66
      %p70 = scmp.eq.s32.totalorder %s9, 0
      %p71 = por %p69, %p70
      %p72 = scmp.ne.s32.totalorder %s64, %s66
      %p73 = scmp.eq.s32.totalorder %s14, 2
      %p74 = por %p72, %p73
      %p75 = scmp.ne.s32.totalorder %s66, %s67
      %p76 = scmp.eq.s32.totalorder %s14, 0
      %p77 = por %p75, %p76
      %p78 = scmp.ne.s32.totalorder %s66, %s67
      %p79 = scmp.eq.s32.totalorder %s15, 2
      %p80 = por %p78, %p79
      %p82 = scmp.ne.s32.totalorder %s67, %s81
      %p83 = scmp.eq.s32.totalorder %s15, 0
      %p84 = por %p82, %p83
      %s85 = ssub.s32 %s9, %s16
      %p86 = scmp.eq.s32.totalorder %s85, 0
      %s88 = sadd.s32 %s87, 1
      %s89 = scalar_select %p86, %s87, %s88
      %p92 = pneg %p86
      %p93 = scmp.eq.s32.totalorder %s9, 2
      %p94 = por %p92, %p93
      %p95 = scmp.ne.s32.totalorder %s87, %s90
      %p96 = scmp.eq.s32.totalorder %s9, 0
      %p97 = por %p95, %p96
      %p98 = scmp.ne.s32.totalorder %s87, %s90
      %p99 = scmp.eq.s32.totalorder %s14, 2
      %p100 = por %p98, %p99
      %p101 = scmp.ne.s32.totalorder %s90, %s91
      %p102 = scmp.eq.s32.totalorder %s14, 0
      %p103 = por %p101, %p102
      %p104 = scmp.ne.s32.totalorder %s90, %s91
      %p105 = scmp.eq.s32.totalorder %s15, 2
      %p106 = por %p104, %p105
      %p108 = scmp.ne.s32.totalorder %s91, %s107
      %p109 = scmp.eq.s32.totalorder %s15, 0
      %p110 = por %p108, %p109
      %p111 = scmp.le.s32.totalorder 1, %s9
      %p112 = scmp.lt.s32.totalorder %s9, 4
      %p113 = pnand %p111, %p112
      %p114 = pneg %p113
      // Predicated region
      $region9: #{_diag_gaussian_forward.1} parent=5 // pred_check
        _
      $region10: #{_diag_gaussian_forward.1} parent=5 // pred_check_branch
        %116 = sbr.rel (%p113) target = $region12
      $region11: #{_diag_gaussian_forward.1} parent=5 // pred_region
        %s117 = ssub.s32 %s9, 1
        // Predicated region
        $region13: #{_diag_gaussian_forward.1} parent=11 // pred_check
          %p118 = pneg %p56
        $region14: #{_diag_gaussian_forward.1} parent=11 // pred_check_branch
          %120 = sbr.rel (%p118) target = $region16
        $region15: #{_diag_gaussian_forward.1} parent=11 // pred_region
          _
        $region16: #{_diag_gaussian_forward.1} parent=11 // pred_fallthru
          _
        // Predicated region
        $region17: #{_diag_gaussian_forward.1} parent=11 // pred_check
          %p121 = pneg %p77
        $region18: #{_diag_gaussian_forward.1} parent=11 // pred_check_branch
          %123 = sbr.rel (%p121) target = $region20
        $region19: #{_diag_gaussian_forward.1} parent=11 // pred_region
          _
        $region20: #{_diag_gaussian_forward.1} parent=11 // pred_fallthru
          _
      $region12: #{_diag_gaussian_forward.1} parent=5 // pred_fallthru
        _
      %p124 = scmp.lt.s32.totalorder %s9, 3
      // Predicated region
      $region21: #{_diag_gaussian_forward.1} parent=5 // pred_check
        %p125 = pneg %p124
      $region22: #{_diag_gaussian_forward.1} parent=5 // pred_check_branch
        %127 = sbr.rel (%p125) target = $region24
      $region23: #{_diag_gaussian_forward.1} parent=5 // pred_region
        // Predicated region
        $region25: #{_diag_gaussian_forward.1} parent=23 // pred_check
          %p128 = pneg %p29
        $region26: #{_diag_gaussian_forward.1} parent=23 // pred_check_branch
          %130 = sbr.rel (%p128) target = $region28
        $region27: #{_diag_gaussian_forward.1} parent=23 // pred_region
          %s131 = smul.u32 2, %s9
          %s132 = ssub.s32 5, %s131
          %p133 = scmp.lt.s32.totalorder %s132, 2
          %s134 = scalar_select %p133, %s132, 2
          %s135 = smul.u32 128, %s134
          %p136 = scmp.lt.s32.totalorder %s131, 4
          %s137 = scalar_select %p136, %s131, 4
          %s138 = smul.addr %s137, 8
          %s139 = scalar_lea.vmem %s0, %s138
          %s140 = smul.u32 2, %s9
          %s141 = ssub.s32 5, %s140
          %p142 = scmp.lt.s32.totalorder %s141, 2
          %s143 = scalar_select %p142, %s141, 2
          %s144 = smul.u32 128, %s143
        $region28: #{_diag_gaussian_forward.1} parent=23 // pred_fallthru
          _
      $region24: #{_diag_gaussian_forward.1} parent=5 // pred_fallthru
        _
      %p145 = scmp.le.s32.totalorder 1, %s9
      %p146 = scmp.lt.s32.totalorder %s9, 4
      %p147 = pnand %p145, %p146
      %p148 = pneg %p147
      // Predicated region
      $region29: #{_diag_gaussian_forward.1} parent=5 // pred_check
        _
      $region30: #{_diag_gaussian_forward.1} parent=5 // pred_check_branch
        %150 = sbr.rel (%p147) target = $region32
      $region31: #{_diag_gaussian_forward.1} parent=5 // pred_region
        %s151 = ssub.s32 %s9, 1
        %s152 = smul.u32 2, %s14
        %s153 = ssub.s32 5, %s152
        %p154 = scmp.lt.s32.totalorder %s153, 2
        %s155 = scalar_select %p154, %s153, 2
        %s156 = smul.u32 128, %s155
        %p157 = scmp.lt.s32.totalorder %s152, 4
        %s158 = scalar_select %p157, %s152, 4
        %s159 = smul.addr %s158, 8
        %s160 = scalar_lea.vmem %s0, %s159
        %p161 = pneg %p35
        %p162 = pneg %p32
        %p163 = pneg %p56
        %p164 = pneg %p53
        %p165 = pneg %p77
        %p166 = pneg %p74
        %p167 = pneg %p103
        %p168 = pneg %p100
        %s169 = sand.u32 %s90, 1
        %s170 = sand.u32 %s90, 1
        %s171 = smul.addr %s170, 16
        %s172 = scalar_lea.vmem [#allocation2], %s171
        %s173 = smul.u32 2, %s14
        %s174 = ssub.s32 5, %s173
        %p175 = scmp.lt.s32.totalorder %s174, 2
        %s176 = scalar_select %p175, %s174, 2
        %s177 = smul.u32 128, %s176
        %p178 = scmp.lt.s32.totalorder %s173, 4
        %s179 = scalar_select %p178, %s173, 4
        %s180 = smul.addr %s179, 8
        %s181 = scalar_lea.vmem %s0, %s180
        %s182 = smul.u32 2, %s14
        %s183 = ssub.s32 5, %s182
        %p184 = scmp.lt.s32.totalorder %s183, 2
        %s185 = scalar_select %p184, %s183, 2
        %s186 = smul.u32 128, %s185
        %s187 = smul.u32 2, %s14
        %s188 = ssub.s32 5, %s187
        %p189 = scmp.lt.s32.totalorder %s188, 2
        %s190 = scalar_select %p189, %s188, 2
        %s191 = smul.u32 128, %s190
        %v192 = vld [vmem:[%s181] sm:$0xff]
        %v193 = vld [vmem:[%s181 + $0x8] sm:$0xff]
        %v194 = vld [vmem:[%s1] sm:$0xff]
        %v195 = vld [vmem:[%s1 + $0x8] sm:$0xff]
        %v196 = vld [vmem:[%s1 + $0x10] sm:$0xff]
        %v197 = vld [vmem:[%s1 + $0x18] sm:$0xff]
        %v198 = vld [vmem:[%s2] sm:$0x1]
        %v200 = vlaneseq
        %v201 = vshrl.u32 %v200, 7
        %v202 = vsub.s32 0, %v201
        %v203 = vrot.slane %v198, %v202
        %vm205 = vcmask 261120
        %v207 = vsel %vm205, %v192, 0
        %v210 = vsel %vm205, %v193, 0
        %212 = vmatprep.subr.mxu0 0.0
        %213 = vmatpush1.msra.mxu0 0.0
        %214 = vmatprep.subr.mxu0 0.0
        %215 = vmatpush1.msra.mxu0 0.0
        %216 = vmatprep.subr.mxu0 0.0
        %217 = vmatpush1.msra.mxu0 0.0
        %218 = vmatprep.subr.mxu0 0.0
        %219 = vmatpush1.msra.mxu0 0.0
        %220 = vmatprep.subr.mxu0 0.0
        %221 = vmatpush1.msra.mxu0 0.0
        %222 = vmatprep.subr.mxu0 0.0
        %223 = vmatpush1.msra.mxu0 0.0
        %224 = vmatprep.subr.mxu0 0.0
        %225 = vmatpush1.msra.mxu0 0.0
        %226 = vmatprep.subr.mxu0 0.0
        %227 = vmatpush1.msra.mxu0 0.0
        %228 = vmatprep.subr.mxu0 0.0
        %229 = vmatpush1.msra.mxu0 0.0
        %230 = vmatprep.subr.mxu0 0.0
        %231 = vmatpush1.msra.mxu0 0.0
        %232 = vmatprep.subr.mxu0 0.0
        %233 = vmatpush1.msra.mxu0 0.0
        %234 = vmatprep.subr.mxu0 0.0
        %235 = vmatpush1.msra.mxu0 0.0
        %236 = vmatprep.subr.mxu0 0.0
        %237 = vmatpush1.msra.mxu0 %v197
        %238 = vmatprep.subr.mxu0 0.0
        %239 = vmatpush1.msra.mxu0 %v196
        %240 = vmatprep.subr.mxu0 0.0
        %241 = vmatpush1.msra.mxu0 %v195
        %242 = vmatprep.subr.mxu0 0.0
        %243 = vmatpush1.msra.mxu0 %v194
        %244 = vmatprep.subr.mxu0 0.0
        %245 = vmatpush2.msra.mxu0 0.0
        %246 = vmatprep.subr.mxu0 0.0
        %247 = vmatpush2.msra.mxu0 0.0
        %248 = vmatprep.subr.mxu0 0.0
        %249 = vmatpush2.msra.mxu0 0.0
        %250 = vmatprep.subr.mxu0 0.0
        %251 = vmatpush2.msra.mxu0 0.0
        %252 = vmatprep.subr.mxu0 0.0
        %253 = vmatpush2.msra.mxu0 0.0
        %254 = vmatprep.subr.mxu0 0.0
        %255 = vmatpush2.msra.mxu0 0.0
        %256 = vmatprep.subr.mxu0 0.0
        %257 = vmatpush2.msra.mxu0 0.0
        %258 = vmatprep.subr.mxu0 0.0
        %259 = vmatpush2.msra.mxu0 0.0
        %260 = vmatprep.subr.mxu0 0.0
        %261 = vmatpush2.msra.mxu0 0.0
        %262 = vmatprep.subr.mxu0 0.0
        %263 = vmatpush2.msra.mxu0 0.0
        %264 = vmatprep.subr.mxu0 0.0
        %265 = vmatpush2.msra.mxu0 0.0
        %266 = vmatprep.subr.mxu0 0.0
        %267 = vmatpush2.msra.mxu0 0.0
        %268 = vmatprep.subr.mxu0 0.0
        %269 = vmatpush2.msra.mxu0 0.0
        %270 = vmatprep.subr.mxu0 0.0
        %271 = vmatpush2.msra.mxu0 0.0
        %272 = vmatprep.subr.mxu0 0.0
        %273 = vmatpush2.msra.mxu0 0.0
        %274 = vmatprep.subr.mxu0 0.0
        %275 = vmatpush2.msra.mxu0 0.0
        %276 = vmatprep.mubr.f32.mxu0 0.0
        %277 = vmatmul.mubr.f32.gmra.mxu0 %v207
        %v278 = vpop.f32.mrf.mxu0
        %v279 = vadd.f32 %v203, %v278
        %v280 = vpop.f32.mrf.mxu0
        %281 = vmatprep.mubr.f32.mxu0 0.0
        %282 = vmatmul.mubr.f32.gmra.mxu0 %v210
        %v283 = vpop.f32.mrf.mxu0
        %v284 = vadd.f32 %v203, %v283
        %v285 = vpop.f32.mrf.mxu0
        %286 = vdwg.mxu0
        %vm287 = vcmask 64512
        %288 = vst.msk [vmem:[%s172] sm:$0xff] %vm287, %v279
        %289 = vst.msk [vmem:[%s172 + $0x8] sm:$0xff] %vm287, %v284
        %s290 = sand.u32 %s90, 1
        %s291 = sand.u32 %s90, 1
        %s292 = smul.addr %s291, 16
        %s293 = scalar_lea.vmem [#allocation2], %s292
        // Predicated region
        $region33: #{_diag_gaussian_forward.1} parent=31 // pred_check
          %p294 = pneg %p100
        $region34: #{_diag_gaussian_forward.1} parent=31 // pred_check_branch
          %296 = sbr.rel (%p294) target = $region36
        $region35: #{_diag_gaussian_forward.1} parent=31 // pred_region
          %s297 = smul.u32 2, %s14
          %s298 = ssub.s32 5, %s297
          %p299 = scmp.lt.s32.totalorder %s298, 2
          %s300 = scalar_select %p299, %s298, 2
          %s301 = smul.u32 128, %s300
          %p302 = scmp.ne.s32.totalorder 0, %s301
          %s303 = smul.addr %s297, 8
          %s304 = scalar_lea.vmem %s3, %s303
          // Predicated region
          $region37: #{_diag_gaussian_forward.1} parent=35 // pred_check
            %p305 = pneg %p302
          $region38: #{_diag_gaussian_forward.1} parent=35 // pred_check_branch
            %307 = sbr.rel (%p305) target = $region40
          $region39: #{_diag_gaussian_forward.1} parent=35 // pred_region
            // Predicated region
            $region41: #{_diag_gaussian_forward.1} parent=39 // pred_check
              _
            $region42: #{_diag_gaussian_forward.1} parent=39 // pred_check_branch
              %309 = sbr.rel (0) target = $region44
            $region43: #{_diag_gaussian_forward.1} parent=39 // pred_region
              // Predicated region
              $region63: #{_diag_gaussian_forward.1} parent=43 // pred_check
                _
              $region64: #{_diag_gaussian_forward.1} parent=43 // pred_check_branch
                %361 = sbr.rel (0) target = $region66
              $region65: #{_diag_gaussian_forward.1} parent=43 // pred_region
                %s362 = sshrl.u32 %s300, 1
                // While loop
                $region67: #{_diag_gaussian_forward.1} parent=65 // loop_pre_header
                  _
                $region68: #{_diag_gaussian_forward.1} parent=65 // loop_header
                  %s364 = sphi 0, %s366
                  %p365 = scmp.ge.s32.totalorder %s364, %s362
                  %s369 = sphi 0, %s378
                  %s370 = sphi %s293, %s381
                  %s371 = sphi %s304, %s382
                $region69: #{_diag_gaussian_forward.1} parent=65 // loop_header_branch
                  %368 = sbr.rel (%p365) target = $region73
                $region70: #{_diag_gaussian_forward.1} parent=65 // loop_body
                  %v372 = vld [vmem:[%s370] sm:$0xff]
                  %373 = vst [vmem:[%s371] sm:$0xff] %v372
                  %v374 = vld [vmem:[%s370 + $0x8] sm:$0xff]
                  %375 = vst [vmem:[%s371 + $0x8] sm:$0xff] %v374
                  %s376 = sadd.s32 1, %s369
                  %p377 = scmp.ge.s32.totalorder %s376, %s362
                  %s378 = scalar_select %p377, 0, %s376
                  %s379 = smul.u32 %s378, 16
                  %s380 = smul.u32 %s378, 16
                  %s381 = scalar_lea.vmem %s293, %s379 [#allocation2]
                  %s382 = scalar_lea.vmem %s304, %s380
                $region71: #{_diag_gaussian_forward.1} parent=65 // loop_footer
                  %s366 = sadd.s32 %s364, 1
                $region72: #{_diag_gaussian_forward.1} parent=65 // loop_footer_branch
                  %363 = sbr.rel target = $region68
                $region73: #{_diag_gaussian_forward.1} parent=65 // loop_exit
                  _
                %s383 = sshrl.u32 %s300, 1
                %s384 = sand.u32 %s300, 1
                %s385 = smul.u32 %s383, 2
                %s386 = smul.u32 8, %s385
                %s387 = scalar_lea.vmem %s293, %s386 [#allocation2]
                %s388 = smul.u32 8, %s385
                %s389 = scalar_lea.vmem %s304, %s388
                // While loop
                $region74: #{_diag_gaussian_forward.1} parent=65 // loop_pre_header
                  _
                $region75: #{_diag_gaussian_forward.1} parent=65 // loop_header
                  %s391 = sphi 0, %s393
                  %p392 = scmp.ge.s32.totalorder %s391, %s384
                  %s396 = sphi 0, %s403
                  %s397 = sphi %s387, %s406
                  %s398 = sphi %s389, %s407
                $region76: #{_diag_gaussian_forward.1} parent=65 // loop_header_branch
                  %395 = sbr.rel (%p392) target = $region80
                $region77: #{_diag_gaussian_forward.1} parent=65 // loop_body
                  %v399 = vld [vmem:[%s397] sm:$0xff]
                  %400 = vst [vmem:[%s398] sm:$0xff] %v399
                  %s401 = sadd.s32 1, %s396
                  %p402 = scmp.ge.s32.totalorder %s401, %s384
                  %s403 = scalar_select %p402, 0, %s401
                  %s404 = smul.u32 %s403, 8
                  %s405 = smul.u32 %s403, 8
                  %s406 = scalar_lea.vmem %s387, %s404 [#allocation2]
                  %s407 = scalar_lea.vmem %s389, %s405
                $region78: #{_diag_gaussian_forward.1} parent=65 // loop_footer
                  %s393 = sadd.s32 %s391, 1
                $region79: #{_diag_gaussian_forward.1} parent=65 // loop_footer_branch
                  %390 = sbr.rel target = $region75
                $region80: #{_diag_gaussian_forward.1} parent=65 // loop_exit
                  _
              $region66: #{_diag_gaussian_forward.1} parent=43 // pred_fallthru
                _
              // Predicated region
              $region81: #{_diag_gaussian_forward.1} parent=43 // pred_check
                _
              $region82: #{_diag_gaussian_forward.1} parent=43 // pred_check_branch
                %409 = sbr.rel target = $region84
              $region83: #{_diag_gaussian_forward.1} parent=43 // pred_region
                _
              $region84: #{_diag_gaussian_forward.1} parent=43 // pred_fallthru
                _
            $region44: #{_diag_gaussian_forward.1} parent=39 // pred_fallthru
              _
            // Predicated region
            $region45: #{_diag_gaussian_forward.1} parent=39 // pred_check
              _
            $region46: #{_diag_gaussian_forward.1} parent=39 // pred_check_branch
              %311 = sbr.rel target = $region48
            $region47: #{_diag_gaussian_forward.1} parent=39 // pred_region
              %s313 = ssub.s32 256, 1
              %s314 = sshrl.u32 %s300, 1
              // While loop
              $region49: #{_diag_gaussian_forward.1} parent=47 // loop_pre_header
                _
              $region50: #{_diag_gaussian_forward.1} parent=47 // loop_header
                %s316 = sphi 0, %s318
                %p317 = scmp.ge.s32.totalorder %s316, %s314
                %s321 = sphi 0, %s330
                %s322 = sphi %s293, %s333
                %s323 = sphi %s304, %s334
              $region51: #{_diag_gaussian_forward.1} parent=47 // loop_header_branch
                %320 = sbr.rel (%p317) target = $region55
              $region52: #{_diag_gaussian_forward.1} parent=47 // loop_body
                %v324 = vld [vmem:[%s322] sm:%s313]
                %325 = vst [vmem:[%s323] sm:%s313] %v324
                %v326 = vld [vmem:[%s322 + $0x8] sm:%s313]
                %327 = vst [vmem:[%s323 + $0x8] sm:%s313] %v326
                %s328 = sadd.s32 1, %s321
                %p329 = scmp.ge.s32.totalorder %s328, %s314
                %s330 = scalar_select %p329, 0, %s328
                %s331 = smul.u32 %s330, 16
                %s332 = smul.u32 %s330, 16
                %s333 = scalar_lea.vmem %s293, %s331 [#allocation2]
                %s334 = scalar_lea.vmem %s304, %s332
              $region53: #{_diag_gaussian_forward.1} parent=47 // loop_footer
                %s318 = sadd.s32 %s316, 1
              $region54: #{_diag_gaussian_forward.1} parent=47 // loop_footer_branch
                %315 = sbr.rel target = $region50
              $region55: #{_diag_gaussian_forward.1} parent=47 // loop_exit
                _
              %s335 = sshrl.u32 %s300, 1
              %s336 = sand.u32 %s300, 1
              %s337 = smul.u32 %s335, 2
              %s338 = smul.u32 8, %s337
              %s339 = scalar_lea.vmem %s293, %s338 [#allocation2]
              %s340 = smul.u32 8, %s337
              %s341 = scalar_lea.vmem %s304, %s340
              // While loop
              $region56: #{_diag_gaussian_forward.1} parent=47 // loop_pre_header
                _
              $region57: #{_diag_gaussian_forward.1} parent=47 // loop_header
                %s343 = sphi 0, %s345
                %p344 = scmp.ge.s32.totalorder %s343, %s336
                %s348 = sphi 0, %s355
                %s349 = sphi %s339, %s358
                %s350 = sphi %s341, %s359
              $region58: #{_diag_gaussian_forward.1} parent=47 // loop_header_branch
                %347 = sbr.rel (%p344) target = $region62
              $region59: #{_diag_gaussian_forward.1} parent=47 // loop_body
                %v351 = vld [vmem:[%s349] sm:%s313]
                %352 = vst [vmem:[%s350] sm:%s313] %v351
                %s353 = sadd.s32 1, %s348
                %p354 = scmp.ge.s32.totalorder %s353, %s336
                %s355 = scalar_select %p354, 0, %s353
                %s356 = smul.u32 %s355, 8
                %s357 = smul.u32 %s355, 8
                %s358 = scalar_lea.vmem %s339, %s356 [#allocation2]
                %s359 = scalar_lea.vmem %s341, %s357
              $region60: #{_diag_gaussian_forward.1} parent=47 // loop_footer
                %s345 = sadd.s32 %s343, 1
              $region61: #{_diag_gaussian_forward.1} parent=47 // loop_footer_branch
                %342 = sbr.rel target = $region57
              $region62: #{_diag_gaussian_forward.1} parent=47 // loop_exit
                _
            $region48: #{_diag_gaussian_forward.1} parent=39 // pred_fallthru
              _
          $region40: #{_diag_gaussian_forward.1} parent=35 // pred_fallthru
            _
          %410 = vnop
        $region36: #{_diag_gaussian_forward.1} parent=31 // pred_fallthru
          _
      $region32: #{_diag_gaussian_forward.1} parent=5 // pred_fallthru
        _
      %p411 = scmp.le.s32.totalorder 2, %s9
      // Predicated region
      $region85: #{_diag_gaussian_forward.1} parent=5 // pred_check
        %p412 = pneg %p411
      $region86: #{_diag_gaussian_forward.1} parent=5 // pred_check_branch
        %414 = sbr.rel (%p412) target = $region88
      $region87: #{_diag_gaussian_forward.1} parent=5 // pred_region
        %s415 = ssub.s32 %s9, 2
        // Predicated region
        $region89: #{_diag_gaussian_forward.1} parent=87 // pred_check
          %p416 = pneg %p106
        $region90: #{_diag_gaussian_forward.1} parent=87 // pred_check_branch
          %418 = sbr.rel (%p416) target = $region92
        $region91: #{_diag_gaussian_forward.1} parent=87 // pred_region
          %s419 = sand.u32 %s91, 1
          %s420 = sand.u32 %s91, 1
          %s421 = smul.addr %s420, 16
          %s422 = scalar_lea.vmem [#allocation2], %s421
        $region92: #{_diag_gaussian_forward.1} parent=87 // pred_fallthru
          _
      $region88: #{_diag_gaussian_forward.1} parent=5 // pred_fallthru
        _
    $region6: #{_diag_gaussian_forward.1} parent=1 // loop_footer
      %s13 = sadd.s32 1, %s9
    $region7: #{_diag_gaussian_forward.1} parent=1 // loop_footer_branch
      %8 = sbr.rel target = $region3
    $region8: #{_diag_gaussian_forward.1} parent=1 // loop_exit
      _

</llo_original>
